<compile_context>
chip_gen: v7x
topology: tpu7x:2x2x1
jax: 0.10.0
libtpu: 0.0.40
codegen_flags: <defaults>
</compile_context>

<pallas_src>
import functools

import jax
import jax.numpy as jnp
import numpy as np
from jax import lax
from jax.experimental import pallas as pl
from jax.experimental.pallas import tpu as pltpu


# --------------------------------------------------------------------------
# Per-generation knobs
# --------------------------------------------------------------------------

@functools.lru_cache(maxsize=None)
def _vmem_limit():
    try:
        return int(pltpu.get_tpu_info().vmem_capacity_bytes * 3 // 4)
    except Exception:
        return 64 * 1024 * 1024


@functools.lru_cache(maxsize=None)
def _seq_tile_cap():
    try:
        cap_bytes = pltpu.get_tpu_info().vmem_capacity_bytes
        return 256 if cap_bytes <= (64 << 20) else 512
    except Exception:
        return 256


def _cparams(sem):
    return pltpu.CompilerParams(dimension_semantics=sem,
                                vmem_limit_bytes=_vmem_limit())


def _pick_tile(L, cap=None):
    """Largest (8,128)-legal tile dividing L; whole L if small or indivisible."""
    cap = _seq_tile_cap() if cap is None else cap
    if L <= cap or L % 8 != 0:
        return L
    for t in (512, 256, 128, 64, 32, 16, 8):
        if t <= cap and L % t == 0:
            return t
    return L


def _pick_feature_tile(F, cap=2048):
    """Lane-dense tile (multiple of 128) for the FFN hidden / vocab dimensions."""
    if F <= cap:
        return F
    for t in (2048, 1024, 512, 256, 128):
        if t <= cap and F % t == 0:
            return t
    return F


def _check_seq_tile(L, t, name):
    assert L % t == 0, f"{name}={t} must divide the sequence length {L}"
    assert t == L or t % 8 == 0, f"{name}={t} must be a multiple of 8 ((8,128) rule)"


# --------------------------------------------------------------------------
# Kernels
# --------------------------------------------------------------------------

def _kv_proj_kernel(kv_ref, wk_ref, wv_ref, k_out_ref, v_out_ref):
    """K = kv @ Wk, V = kv @ Wv, stored bf16.  Runs once per (layer, source)."""
    kv = kv_ref[...].astype(jnp.bfloat16)                       # [tl, E]
    k_out_ref[...] = jnp.dot(kv, wk_ref[...],
                             preferred_element_type=jnp.float32).astype(jnp.bfloat16)
    v_out_ref[...] = jnp.dot(kv, wv_ref[...],
                             preferred_element_type=jnp.float32).astype(jnp.bfloat16)


def _attn_ln_kernel(*refs, heads, causal):
    """Flash-style LayerNorm(MHSA(q, K, V[, mask]) + q) for one (batch, q-tile, k-tile)."""
    if causal:
        (q_ref, k_ref, v_ref, wq_ref, wo_ref, bo_ref, g_ref, b_ref,
         out_ref, qh_scr, m_scr, l_scr, acc_scr) = refs
        mask_ref = None
    else:
        (mask_ref, q_ref, k_ref, v_ref, wq_ref, wo_ref, bo_ref, g_ref, b_ref,
         out_ref, qh_scr, m_scr, l_scr, acc_scr) = refs

    H = heads
    tq, E = q_ref.shape
    tk = k_ref.shape[0]
    D = E // H

    kidx = pl.program_id(2)
    nk = pl.num_programs(2)
    q0 = pl.program_id(1) * tq                   # global row offset of this Q tile
    k0 = kidx * tk                               # global col offset of this K tile

    @pl.when(kidx == 0)
    def _init():
        # Q projection once per q-tile (scale 1/sqrt(E) pre-folded into wq).
        q_bf = q_ref[...].astype(jnp.bfloat16)
        Q = jnp.dot(q_bf, wq_ref[...], preferred_element_type=jnp.float32)
        qh_scr[...] = Q.reshape(tq, H, D).astype(jnp.bfloat16)
        m_scr[...] = jnp.full(m_scr.shape, -1e30, jnp.float32)
        l_scr[...] = jnp.zeros(l_scr.shape, jnp.float32)
        acc_scr[...] = jnp.zeros(acc_scr.shape, jnp.float32)

    def _compute():
        Kh = k_ref[...].reshape(tk, H, D)                        # bf16
        Vh = v_ref[...].reshape(tk, H, D)
        s = jnp.einsum('qhd,khd->hqk', qh_scr[...], Kh,
                       preferred_element_type=jnp.float32)       # [H, tq, tk] f32

        if causal:
            row = q0 + lax.broadcasted_iota(jnp.int32, (tq, tk), 0)
            col = k0 + lax.broadcasted_iota(jnp.int32, (tq, tk), 1)
            keep = row >= col
        else:
            keep = mask_ref[...] != 0                            # int8 mask tile
        # finite sentinel (not -inf) so all-masked rows can never NaN the softmax
        s = jnp.where(keep[None, :, :], s, -1e30)

        m_prev = m_scr[...]
        m_new = jnp.maximum(m_prev, jnp.max(s, axis=-1, keepdims=True))
        alpha = jnp.exp(m_prev - m_new)
        p = jnp.exp(s - m_new)
        l_scr[...] = alpha * l_scr[...] + jnp.sum(p, axis=-1, keepdims=True)
        acc_scr[...] = alpha * acc_scr[...] + jnp.einsum(
            'hqk,khd->hqd', p.astype(jnp.bfloat16), Vh,
            preferred_element_type=jnp.float32)
        m_scr[...] = m_new

    if causal:
        # Skip K tiles that lie entirely above the diagonal of this Q tile.
        pl.when(k0 < q0 + tq)(_compute)
    else:
        _compute()

    @pl.when(kidx == nk - 1)
    def _finalize():
        # Normalize AFTER the PV matmul: divide the [H, tq, D] accumulator, not the
        # [H, tq, Lk] score tensor.
        ctx = acc_scr[...] * (1.0 / l_scr[...])                  # [H, tq, D]
        ctx = jnp.transpose(ctx, (1, 0, 2)).reshape(tq, E).astype(jnp.bfloat16)
        attn_out = jnp.dot(ctx, wo_ref[...],
                           preferred_element_type=jnp.float32) + bo_ref[...]
        # Fused residual + LayerNorm (eps = 1e-5), all in f32.
        y = attn_out + q_ref[...].astype(jnp.float32)
        mean = jnp.mean(y, axis=-1, keepdims=True)
        var = jnp.mean((y - mean) ** 2, axis=-1, keepdims=True)
        out_ref[...] = (((y - mean) * lax.rsqrt(var + 1e-5)) * g_ref[...]
                        + b_ref[...]).astype(out_ref.dtype)


def _ffn_ln_kernel(x_ref, w1_ref, b1_ref, w2_ref, b2_ref, g_ref, b_ref,
                   out_ref, acc_scr):
    """LayerNorm(relu(x@W1+b1)@W2 + b2 + x), F dimension tiled with f32 accumulator."""
    f = pl.program_id(2)
    nf = pl.num_programs(2)
    x_bf = x_ref[...].astype(jnp.bfloat16)                       # [tl, E]

    @pl.when(f == 0)
    def _init():
        acc_scr[...] = x_ref[...].astype(jnp.float32) + b2_ref[...]   # residual + bias

    h = jnp.dot(x_bf, w1_ref[...], preferred_element_type=jnp.float32) + b1_ref[...]
    h = jnp.maximum(h, 0.0).astype(jnp.bfloat16)                 # [tl, tf]
    acc_scr[...] += jnp.dot(h, w2_ref[...], preferred_element_type=jnp.float32)

    @pl.when(f == nf - 1)
    def _finalize():
        y = acc_scr[...]
        mean = jnp.mean(y, axis=-1, keepdims=True)
        var = jnp.mean((y - mean) ** 2, axis=-1, keepdims=True)
        out_ref[...] = (((y - mean) * lax.rsqrt(var + 1e-5)) * g_ref[...]
                        + b_ref[...]).astype(out_ref.dtype)


def _linear_kernel(x_ref, w_ref, b_ref, out_ref):
    """x @ W + b for one (batch, seq-tile, vocab-tile)."""
    x_bf = x_ref[...].astype(jnp.bfloat16)
    out_ref[...] = (jnp.dot(x_bf, w_ref[...], preferred_element_type=jnp.float32)
                    + b_ref[...]).astype(out_ref.dtype)


# --------------------------------------------------------------------------
# Wrappers
# --------------------------------------------------------------------------

def kv_project(kv, wk, wv, *, tile=None):
    """Project K/V once per (layer, source); output bf16 [N, L, E] each."""
    N, L, E = kv.shape
    tl = tile if tile is not None else _pick_tile(L)
    _check_seq_tile(L, tl, "kv_tile")
    row = pl.BlockSpec((None, tl, E), lambda bi, i: (bi, i, 0))
    mat = pl.BlockSpec((E, E), lambda bi, i: (0, 0))
    return pl.pallas_call(
        _kv_proj_kernel,
        out_shape=(jax.ShapeDtypeStruct((N, L, E), jnp.bfloat16),
                   jax.ShapeDtypeStruct((N, L, E), jnp.bfloat16)),
        grid=(N, L // tl),
        in_specs=[row, mat, mat],
        out_specs=(row, row),
        compiler_params=_cparams(("parallel", "parallel")),
    )(kv, wk, wv)


def attn_add_layernorm(q, kh, vh, mask, wq, wo, bo, gamma, beta, heads,
                       *, causal=False, q_tile=None, kv_tile=None):
    """LayerNorm(MHSA(q; precomputed K/V[, mask]) + q), flash-style over K tiles."""
    N, Lq, E = q.shape
    Lk = kh.shape[1]
    H = heads
    D = E // H
    tq = q_tile if q_tile is not None else _pick_tile(Lq)
    tk = kv_tile if kv_tile is not None else _pick_tile(Lk)
    _check_seq_tile(Lq, tq, "q_tile")
    _check_seq_tile(Lk, tk, "kv_tile")
    nq, nk = Lq // tq, Lk // tk

    # Fold 1/sqrt(E) into wq (module scales energy by sqrt(embed_size)); free at prep
    # time and removes a [tq, E] VPU pass per tile.
    wq_s = (wq.astype(jnp.float32) * (E ** -0.5)).astype(jnp.bfloat16)
    bo2 = bo.reshape(1, E)
    g2 = gamma.reshape(1, E)
    b2 = beta.reshape(1, E)

    kern = functools.partial(_attn_ln_kernel, heads=heads, causal=causal)

    row_spec = pl.BlockSpec((None, tq, E), lambda bi, i, j: (bi, i, 0))
    kv_spec = pl.BlockSpec((None, tk, E), lambda bi, i, j: (bi, j, 0))
    mat_spec = pl.BlockSpec((E, E), lambda bi, i, j: (0, 0))
    vec_spec = pl.BlockSpec((1, E), lambda bi, i, j: (0, 0))

    in_specs, args = [], []
    if not causal:
        assert mask is not None, "non-causal attention requires a mask"
        # int8 mask: 4x less HBM traffic than streaming an f32 mask.
        in_specs.append(pl.BlockSpec((None, tq, tk), lambda bi, i, j: (bi, i, j)))
        args.append((mask != 0).astype(jnp.int8))
    in_specs += [row_spec, kv_spec, kv_spec, mat_spec, mat_spec,
                 vec_spec, vec_spec, vec_spec]
    args += [q, kh, vh, wq_s, wo, bo2, g2, b2]

    return pl.pallas_call(
        kern,
        out_shape=jax.ShapeDtypeStruct((N, Lq, E), jnp.bfloat16),
        grid=(N, nq, nk),
        in_specs=in_specs,
        out_specs=row_spec,
        scratch_shapes=[pltpu.VMEM((tq, H, D), jnp.bfloat16),   # cached Q heads
                        pltpu.VMEM((H, tq, 1), jnp.float32),    # running max
                        pltpu.VMEM((H, tq, 1), jnp.float32),    # running denom
                        pltpu.VMEM((H, tq, D), jnp.float32)],   # PV accumulator
        compiler_params=_cparams(("parallel", "parallel", "arbitrary")),
    )(*args)


def ffn_add_layernorm(x, w1, b1, w2, b2, gamma, beta, *, q_tile=None, f_tile=None):
    N, L, E = x.shape
    F = w1.shape[1]
    tl = q_tile if q_tile is not None else _pick_tile(L)
    tf = f_tile if f_tile is not None else _pick_feature_tile(F)
    _check_seq_tile(L, tl, "q_tile")
    assert F % tf == 0

    b1r = b1.reshape(1, F)
    b2r = b2.reshape(1, E)
    gr = gamma.reshape(1, E)
    br = beta.reshape(1, E)

    row = pl.BlockSpec((None, tl, E), lambda bi, i, f: (bi, i, 0))
    return pl.pallas_call(
        _ffn_ln_kernel,
        out_shape=jax.ShapeDtypeStruct((N, L, E), jnp.bfloat16),
        grid=(N, L // tl, F // tf),
        in_specs=[row,
                  pl.BlockSpec((E, tf), lambda bi, i, f: (0, f)),
                  pl.BlockSpec((1, tf), lambda bi, i, f: (0, f)),
                  pl.BlockSpec((tf, E), lambda bi, i, f: (f, 0)),
                  pl.BlockSpec((1, E), lambda bi, i, f: (0, 0)),
                  pl.BlockSpec((1, E), lambda bi, i, f: (0, 0)),
                  pl.BlockSpec((1, E), lambda bi, i, f: (0, 0))],
        out_specs=row,
        scratch_shapes=[pltpu.VMEM((tl, E), jnp.float32)],
        compiler_params=_cparams(("parallel", "parallel", "arbitrary")),
    )(x, w1, b1r, w2, b2r, gr, br)


def linear(x, w, b, *, q_tile=None, v_tile=None):
    N, L, E = x.shape
    V = w.shape[1]
    tl = q_tile if q_tile is not None else _pick_tile(L)
    tv = v_tile if v_tile is not None else _pick_feature_tile(V, cap=4096)
    _check_seq_tile(L, tl, "q_tile")
    assert V % tv == 0
    br = b.reshape(1, V)
    return pl.pallas_call(
        _linear_kernel,
        out_shape=jax.ShapeDtypeStruct((N, L, V), jnp.float32),
        grid=(N, L // tl, V // tv),
        in_specs=[pl.BlockSpec((None, tl, E), lambda bi, i, v: (bi, i, 0)),
                  pl.BlockSpec((E, tv), lambda bi, i, v: (0, v)),
                  pl.BlockSpec((1, tv), lambda bi, i, v: (0, v))],
        out_specs=pl.BlockSpec((None, tl, tv), lambda bi, i, v: (bi, i, v)),
        compiler_params=_cparams(("parallel", "parallel", "parallel")),
    )(x, w, br)


# --------------------------------------------------------------------------
# Parameter init (weights stored pre-transposed [in, out] and in bf16)
# --------------------------------------------------------------------------

def init_params(key, trg_vocab_size, embed_size, num_layers, heads,
                forward_expansion, max_length):
    def w_init(k, shape, scale=0.05):
        return (scale * jax.random.normal(k, shape)).astype(jnp.bfloat16)

    keys = jax.random.split(key, 4 + num_layers)
    E = embed_size
    F = forward_expansion * embed_size
    params = {
        'word_emb': (0.05 * jax.random.normal(keys[0], (trg_vocab_size, E))).astype(jnp.float32),
        'pos_emb': (0.05 * jax.random.normal(keys[1], (max_length, E))).astype(jnp.float32),
        'fc_out_w': w_init(keys[2], (E, trg_vocab_size)),
        'fc_out_b': jnp.zeros((trg_vocab_size,), jnp.float32),
        'layers': [],
    }
    for li in range(num_layers):
        lk = jax.random.split(keys[4 + li], 10)

        def attn(ks):
            return {
                'wq': w_init(ks[0], (E, E)),
                'wk': w_init(ks[1], (E, E)),
                'wv': w_init(ks[2], (E, E)),
                'wo': w_init(ks[3], (E, E)),
                'bo': jnp.zeros((E,), jnp.float32),
            }

        params['layers'].append({
            'self_attn': attn(lk[0:4]),            # DecoderBlock.attention
            'norm_g': jnp.ones((E,), jnp.float32),
            'norm_b': jnp.zeros((E,), jnp.float32),
            'cross_attn': attn(lk[4:8]),           # TransformerBlock.attention
            'norm1_g': jnp.ones((E,), jnp.float32),
            'norm1_b': jnp.zeros((E,), jnp.float32),
            'norm2_g': jnp.ones((E,), jnp.float32),
            'norm2_b': jnp.zeros((E,), jnp.float32),
            'ff_w1': w_init(lk[8], (E, F)),
            'ff_b1': jnp.zeros((F,), jnp.float32),
            'ff_w2': w_init(lk[9], (F, E)),
            'ff_b2': jnp.zeros((E,), jnp.float32),
        })
    return params


# --------------------------------------------------------------------------
# Decoder forward (Pallas for the hot path; embedding gather left to XLA)
# --------------------------------------------------------------------------

def decoder_forward(params, tokens, enc_out, src_mask, trg_mask, heads,
                    *, q_tile=None, kv_tile=None, f_tile=None):
    """trg_mask=None -> standard causal mask generated in-kernel (no HBM mask)."""
    N, L = tokens.shape
    positions = jnp.arange(L)[None, :]
    x = (params['word_emb'][tokens] + params['pos_emb'][positions]).astype(jnp.bfloat16)
    enc_bf = enc_out.astype(jnp.bfloat16)

    causal = trg_mask is None
    for lp in params['layers']:
        # DecoderBlock: masked self-attention, residual + LayerNorm fused.
        sa = lp['self_attn']
        kh, vh = kv_project(x, sa['wk'], sa['wv'], tile=kv_tile)   # K/V hoisted
        query = attn_add_layernorm(
            x, kh, vh, trg_mask, sa['wq'], sa['wo'], sa['bo'],
            lp['norm_g'], lp['norm_b'], heads,
            causal=causal, q_tile=q_tile, kv_tile=kv_tile)

        # TransformerBlock: cross-attention (+LN), FFN (+LN), all fused.
        ca = lp['cross_attn']
        kh2, vh2 = kv_project(enc_bf, ca['wk'], ca['wv'])
        x1 = attn_add_layernorm(
            query, kh2, vh2, src_mask, ca['wq'], ca['wo'], ca['bo'],
            lp['norm1_g'], lp['norm1_b'], heads, causal=False, q_tile=q_tile)

        x = ffn_add_layernorm(
            x1, lp['ff_w1'], lp['ff_b1'], lp['ff_w2'], lp['ff_b2'],
            lp['norm2_g'], lp['norm2_b'], q_tile=q_tile, f_tile=f_tile)

    return linear(x, params['fc_out_w'], params['fc_out_b'], q_tile=q_tile)


# --------------------------------------------------------------------------
# Pure-JAX f32 reference (mirrors the PyTorch math) for correctness checking
# --------------------------------------------------------------------------

def _ref_mhsa(q, kv, mask, p, heads):
    N, Lq, E = q.shape
    Lk = kv.shape[1]
    D = E // heads
    wq = p['wq'].astype(jnp.float32)
    wk = p['wk'].astype(jnp.float32)
    wv = p['wv'].astype(jnp.float32)
    wo = p['wo'].astype(jnp.float32)
    Q = (q @ wq).reshape(N, Lq, heads, D)
    K = (kv @ wk).reshape(N, Lk, heads, D)
    V = (kv @ wv).reshape(N, Lk, heads, D)
    energy = jnp.einsum('nqhd,nkhd->nhqk', Q, K)
    energy = jnp.where(mask[:, None, :, :] == 0.0, -jnp.inf, energy)
    attn = jax.nn.softmax(energy / jnp.sqrt(jnp.float32(E)), axis=3)
    out = jnp.einsum('nhqk,nkhd->nqhd', attn, V).reshape(N, Lq, E)
    return out @ wo + p['bo']


def _ref_ln(y, g, b):
    mean = jnp.mean(y, axis=-1, keepdims=True)
    var = jnp.mean((y - mean) ** 2, axis=-1, keepdims=True)
    return (y - mean) / jnp.sqrt(var + 1e-5) * g + b


def reference_forward(params, tokens, enc_out, src_mask, trg_mask, heads):
    N, L = tokens.shape
    positions = jnp.arange(L)[None, :]
    x = params['word_emb'][tokens] + params['pos_emb'][positions]
    for lp in params['layers']:
        attention = _ref_mhsa(x, x, trg_mask, lp['self_attn'], heads)
        query = _ref_ln(attention + x, lp['norm_g'], lp['norm_b'])
        attention2 = _ref_mhsa(query, enc_out, src_mask, lp['cross_attn'], heads)
        x1 = _ref_ln(attention2 + query, lp['norm1_g'], lp['norm1_b'])
        h = jnp.maximum(x1 @ lp['ff_w1'].astype(jnp.float32) + lp['ff_b1'], 0.0)
        fwd = h @ lp['ff_w2'].astype(jnp.float32) + lp['ff_b2']
        x = _ref_ln(fwd + x1, lp['norm2_g'], lp['norm2_b'])
    return x @ params['fc_out_w'].astype(jnp.float32) + params['fc_out_b']


# --------------------------------------------------------------------------

if __name__ == "__main__":
    # Small config consistent with the module.  Dims chosen so the demo exercises
    # q-tiling, flash K-tiling with causal tile skipping, and FFN F-dim tiling while
    # keeping every block (8,128)-legal.  Real configs should use lane-dense E /
    # vocab (multiples of 128) and head_dim >= 128.
    trg_vocab_size = 32
    embed_size = 64
    num_layers = 2
    heads = 4
    forward_expansion = 4     # F = 256 -> two F tiles of 128
    max_length = 32

    N = 2          # batch
    L_dec = 16     # decoder (target) length; q_tile=kv_tile=8 -> 2x2 flash grid
    L_enc = 16     # encoder length

    key = jax.random.PRNGKey(0)
    kp, kt, ke = jax.random.split(key, 3)

    params = init_params(kp, trg_vocab_size, embed_size, num_layers, heads,
                         forward_expansion, max_length)

    tokens = jax.random.randint(kt, (N, L_dec), 0, trg_vocab_size, dtype=jnp.int32)
    enc_out = (0.1 * jax.random.normal(ke, (N, L_enc, embed_size))).astype(jnp.float32)

    # src_mask: no padding (all ones).  trg_mask=None -> causal mask built in-kernel.
    src_mask = jnp.ones((N, L_dec, L_enc), jnp.float32)

    out = decoder_forward(params, tokens, enc_out, src_mask, None, heads,
                          q_tile=8, kv_tile=8, f_tile=128)
    out = jax.block_until_ready(out)
    assert out.shape == (N, L_dec, trg_vocab_size)

    # f32 reference with an explicit causal trg_mask (same semantics as in-kernel).
    trg_mask = jnp.broadcast_to(
        jnp.tril(jnp.ones((L_dec, L_dec), jnp.float32))[None], (N, L_dec, L_dec))
    ref = reference_forward(params, tokens, enc_out, src_mask, trg_mask, heads)

    # bf16 MXU matmuls + bf16 inter-stage activations => relaxed tolerance.
    np.testing.assert_allclose(np.asarray(out), np.asarray(ref), rtol=5e-2, atol=5e-2)
    print("KERNEL_OK")
</pallas_src>

<mosaic_0001>
module attributes {stable_mosaic.version = 11 : i64} {
  func.func @_kv_proj_kernel(%arg0: i32, %arg1: i32, %arg2: memref<1x8x64xbf16, #tpu.memory_space<vmem>>, %arg3: memref<64x64xbf16, #tpu.memory_space<vmem>>, %arg4: memref<64x64xbf16, #tpu.memory_space<vmem>>, %arg5: memref<1x8x64xbf16, #tpu.memory_space<vmem>>, %arg6: memref<1x8x64xbf16, #tpu.memory_space<vmem>>) attributes {dimension_semantics = [#tpu.dimension_semantics<parallel>, #tpu.dimension_semantics<parallel>], iteration_bounds = array<i64: 2, 2>, scalar_prefetch = 0 : i64, scratch_operands = 0 : i64, tpu.core_type = #tpu.core_type<tc>, window_params = [{transform_indices = @transform_0, window_bounds = array<i64: 1, 8, 64>}, {pipeline_mode = #tpu.pipeline_mode<synchronous>, transform_indices = @transform_1, window_bounds = array<i64: 64, 64>}, {pipeline_mode = #tpu.pipeline_mode<synchronous>, transform_indices = @transform_2, window_bounds = array<i64: 64, 64>}, {transform_indices = @transform_3, window_bounds = array<i64: 1, 8, 64>}, {transform_indices = @transform_4, window_bounds = array<i64: 1, 8, 64>}]} {
    %c0 = arith.constant 0 : index
    %c0_0 = arith.constant 0 : index
    %c0_1 = arith.constant 0 : index
    %0 = vector.load %arg2[%c0, %c0_0, %c0_1] : memref<1x8x64xbf16, #tpu.memory_space<vmem>>, vector<1x8x64xbf16>
    %1 = vector.shape_cast %0 : vector<1x8x64xbf16> to vector<8x64xbf16>
    %c0_2 = arith.constant 0 : index
    %c0_3 = arith.constant 0 : index
    %2 = vector.load %arg3[%c0_2, %c0_3] : memref<64x64xbf16, #tpu.memory_space<vmem>>, vector<64x64xbf16>
    %cst = arith.constant dense<0.000000e+00> : vector<8x64xf32>
    %3 = tpu.matmul %1, %2, %cst {dimension_numbers = #tpu.dot_dimension_numbers<[1], [0], [0], [1], [0, 0, 1, 1], [], []>} : vector<8x64xbf16>, vector<64x64xbf16>, vector<8x64xf32> -> vector<8x64xf32>
    %4 = arith.truncf %3 : vector<8x64xf32> to vector<8x64xbf16>
    %c0_4 = arith.constant 0 : index
    %c0_5 = arith.constant 0 : index
    %c0_6 = arith.constant 0 : index
    %5 = vector.load %arg5[%c0_4, %c0_5, %c0_6] : memref<1x8x64xbf16, #tpu.memory_space<vmem>>, vector<1x8x64xbf16>
    %6 = vector.shape_cast %5 : vector<1x8x64xbf16> to vector<8x64xbf16>
    %7 = vector.shape_cast %4 : vector<8x64xbf16> to vector<1x8x64xbf16>
    tpu.vector_store %arg5[%c0_4, %c0_5, %c0_6], %7 {strides = array<i32>} : memref<1x8x64xbf16, #tpu.memory_space<vmem>>, vector<1x8x64xbf16>,
    %c0_7 = arith.constant 0 : index
    %c0_8 = arith.constant 0 : index
    %8 = vector.load %arg4[%c0_7, %c0_8] : memref<64x64xbf16, #tpu.memory_space<vmem>>, vector<64x64xbf16>
    %cst_9 = arith.constant dense<0.000000e+00> : vector<8x64xf32>
    %9 = tpu.matmul %1, %8, %cst_9 {dimension_numbers = #tpu.dot_dimension_numbers<[1], [0], [0], [1], [0, 0, 1, 1], [], []>} : vector<8x64xbf16>, vector<64x64xbf16>, vector<8x64xf32> -> vector<8x64xf32>
    %10 = arith.truncf %9 : vector<8x64xf32> to vector<8x64xbf16>
    %c0_10 = arith.constant 0 : index
    %c0_11 = arith.constant 0 : index
    %c0_12 = arith.constant 0 : index
    %11 = vector.load %arg6[%c0_10, %c0_11, %c0_12] : memref<1x8x64xbf16, #tpu.memory_space<vmem>>, vector<1x8x64xbf16>
    %12 = vector.shape_cast %11 : vector<1x8x64xbf16> to vector<8x64xbf16>
    %13 = vector.shape_cast %10 : vector<8x64xbf16> to vector<1x8x64xbf16>
    tpu.vector_store %arg6[%c0_10, %c0_11, %c0_12], %13 {strides = array<i32>} : memref<1x8x64xbf16, #tpu.memory_space<vmem>>, vector<1x8x64xbf16>,
    return
  }
  func.func @transform_0(%arg0: i32, %arg1: i32) -> (i32, i32, i32) {
    %c0_i32 = arith.constant 0 : i32
    %c0_i32_0 = arith.constant 0 : i32
    return %arg0, %arg1, %c0_i32 : i32, i32, i32
  }
  func.func @transform_1(%arg0: i32, %arg1: i32) -> (i32, i32) {
    %c0_i32 = arith.constant 0 : i32
    %c0_i32_0 = arith.constant 0 : i32
    %c0_i32_1 = arith.constant 0 : i32
    return %c0_i32, %c0_i32_0 : i32, i32
  }
  func.func @transform_2(%arg0: i32, %arg1: i32) -> (i32, i32) {
    %c0_i32 = arith.constant 0 : i32
    %c0_i32_0 = arith.constant 0 : i32
    %c0_i32_1 = arith.constant 0 : i32
    return %c0_i32, %c0_i32_0 : i32, i32
  }
  func.func @transform_3(%arg0: i32, %arg1: i32) -> (i32, i32, i32) {
    %c0_i32 = arith.constant 0 : i32
    %c0_i32_0 = arith.constant 0 : i32
    return %arg0, %arg1, %c0_i32 : i32, i32, i32
  }
  func.func @transform_4(%arg0: i32, %arg1: i32) -> (i32, i32, i32) {
    %c0_i32 = arith.constant 0 : i32
    %c0_i32_0 = arith.constant 0 : i32
    return %arg0, %arg1, %c0_i32 : i32, i32, i32
  }
}

</mosaic_0001>

<llo_original>
// kernel: tpu_custom_call.1
$region0: #{tpu_custom_call.1}
  #allocation0 [shape = 'u32[]', space=smem, size = 0x4, offset = 0x4, fixed_abs, tag = 'smem constant byte address 0x4 - core index']
  #allocation1 [shape = 'u32[144,128]{1,0:T(1,128)}', space=vmem, size = 0x12000, scoped, tag = 'internal scratch']
  %s0 = inlined_call_operand.hbm [shape: bf16[2,16,64], index: 0, kind: input, shape index: {}]
  %s1 = inlined_call_operand.hbm [shape: bf16[64,64], index: 1, kind: input, shape index: {}]
  %s2 = inlined_call_operand.hbm [shape: bf16[64,64], index: 2, kind: input, shape index: {}]
  %s3 = inlined_call_operand.hbm [shape: bf16[2,16,64], index: 3, kind: output, shape index: {0}]
  %s4 = inlined_call_operand.hbm [shape: bf16[2,16,64], index: 4, kind: output, shape index: {1}]
  %5 = xla_tuple %s3, %s4
  %s6 = sld [smem:[#allocation0]]
  $region65: #{tpu_custom_call.1} parent=0
    _
  %s8 = ssub.s32 1, %s6
  %s9 = scalar_select 0, %s8, %s6
  $region1: #{tpu_custom_call.1} parent=0
    #allocation2 [shape = 'u8[4096]{0}', space=vmem, size = 0x1000, scoped, tag = 'input window, operand 0']
    #allocation3 [shape = 's32[2]{0}', space=sflag, size = 0x8, scoped, tag = 'scoped memory for tpu_custom_call.1']
    #allocation4 [shape = 's32[2]{0}', space=sflag, size = 0x8, scoped, tag = 'scoped memory for tpu_custom_call.1']
    #allocation5 [shape = 'u8[16384]{0}', space=vmem, size = 0x4000, scoped, tag = 'input window, operand 1, single buffered']
    #allocation6 [shape = 's32[1]{0}', space=sflag, size = 0x4, scoped, tag = 'scoped memory for tpu_custom_call.1']
    #allocation7 [shape = 'u8[16384]{0}', space=vmem, size = 0x4000, scoped, tag = 'input window, operand 2, single buffered']
    #allocation8 [shape = 'u8[4096]{0}', space=vmem, size = 0x1000, scoped, tag = 'output window, operand 0']
    #allocation9 [shape = 'u8[4096]{0}', space=vmem, size = 0x1000, scoped, tag = 'output window, operand 1']
    #allocation10 [shape = 's32[2]{0}', space=sflag, size = 0x8, scoped, tag = 'scoped memory for tpu_custom_call.1']
    %10 = vsyncpa [#allocation3], 0
    %s11 = scalar_lea.sflag [#allocation3], 1
    %12 = vsyncpa %s11, 0
    %13 = vsyncpa [#allocation6], 0
    %14 = vsyncpa [#allocation4], 0
    %s15 = scalar_lea.sflag [#allocation4], 1
    %16 = vsyncpa %s15, 0
    %17 = vsyncpa [#allocation10], 0
    %s18 = scalar_lea.sflag [#allocation10], 1
    %19 = vsyncpa %s18, 0
    loop: start=0, step=1, limit=6
    $region2: #{tpu_custom_call.1} parent=1 // loop_pre_header
      _
    $region3: #{tpu_custom_call.1} parent=1 // loop_header
      %s21 = sphi 0, %s25
      %p22 = scmp.ge.s32.totalorder %s21, 6
      %s28 = sphi 0, %s40
      %s29 = sphi 0, %s36
      %s30 = sphi 0, %s28
      %s31 = sphi 0, %s29
      %s32 = sphi 0, %s30
      %s33 = sphi 0, %s31
      %s45 = sphi 0, %s47
      %s48 = sphi 0, %s45
      %s49 = sphi 0, %s48
      %s65 = sphi 0, %s49
      %s69 = sphi 0, %s69
      %s71 = sphi 0, %s69
      %s72 = sphi 0, %s71
      %s86 = sphi 0, %s72
      %s90 = sphi 0, %s90
      %s92 = sphi 0, %s90
      %s93 = sphi 0, %s92
      %s107 = sphi 0, %s93
      %s115 = sphi 0, %s117
      %s118 = sphi 0, %s115
      %s119 = sphi 0, %s118
      %s135 = sphi 0, %s119
      %s143 = sphi 0, %s145
      %s146 = sphi 0, %s143
      %s147 = sphi 0, %s146
      %s163 = sphi 0, %s147
    $region4: #{tpu_custom_call.1} parent=1 // loop_header_branch
      %24 = sbr.rel (%p22) target = $region8
    $region5: #{tpu_custom_call.1} parent=1 // loop_body
      %s26 = ssub.s32 %s21, 1
      %s27 = ssub.s32 %s21, 2
      %s34 = sadd.s32 1, %s29
      %p35 = scmp.ge.s32.totalorder %s34, 2
      %s36 = scalar_select %p35, 0, %s34
      %s37 = sadd.s32 1, %s28
      %s38 = scalar_select %p35, %s37, %s28
      %p39 = scmp.ge.s32.totalorder %s38, 2
      %s40 = scalar_select %p39, 0, %s38
      %s41 = ssub.s32 %s28, %s40
      %s42 = ssub.s32 %s29, %s36
      %s43 = sor.u32 %s41, %s42
      %p44 = scmp.eq.s32.totalorder %s43, 0
      %s46 = sadd.s32 %s45, 1
      %s47 = scalar_select %p44, %s45, %s46
      %p50 = pneg %p44
      %p51 = scmp.eq.s32.totalorder %s21, 3
      %p52 = por %p50, %p51
      %p53 = scmp.ne.s32.totalorder %s45, %s48
      %p54 = scmp.eq.s32.totalorder %s21, 0
      %p55 = por %p53, %p54
      %p56 = scmp.ne.s32.totalorder %s45, %s48
      %p57 = scmp.eq.s32.totalorder %s26, 3
      %p58 = por %p56, %p57
      %p59 = scmp.ne.s32.totalorder %s48, %s49
      %p60 = scmp.eq.s32.totalorder %s26, 0
      %p61 = por %p59, %p60
      %p62 = scmp.ne.s32.totalorder %s48, %s49
      %p63 = scmp.eq.s32.totalorder %s27, 3
      %p64 = por %p62, %p63
      %p66 = scmp.ne.s32.totalorder %s49, %s65
      %p67 = scmp.eq.s32.totalorder %s27, 0
      %p68 = por %p66, %p67
      %s70 = sadd.s32 %s69, 1
      %p73 = scmp.eq.s32.totalorder %s21, 3
      %p74 = scmp.ne.s32.totalorder %s69, %s71
      %p75 = scmp.eq.s32.totalorder %s21, 0
      %p76 = por %p74, %p75
      %p77 = scmp.ne.s32.totalorder %s69, %s71
      %p78 = scmp.eq.s32.totalorder %s26, 3
      %p79 = por %p77, %p78
      %p80 = scmp.ne.s32.totalorder %s71, %s72
      %p81 = scmp.eq.s32.totalorder %s26, 0
      %p82 = por %p80, %p81
      %p83 = scmp.ne.s32.totalorder %s71, %s72
      %p84 = scmp.eq.s32.totalorder %s27, 3
      %p85 = por %p83, %p84
      %p87 = scmp.ne.s32.totalorder %s72, %s86
      %p88 = scmp.eq.s32.totalorder %s27, 0
      %p89 = por %p87, %p88
      %s91 = sadd.s32 %s90, 1
      %p94 = scmp.eq.s32.totalorder %s21, 3
      %p95 = scmp.ne.s32.totalorder %s90, %s92
      %p96 = scmp.eq.s32.totalorder %s21, 0
      %p97 = por %p95, %p96
      %p98 = scmp.ne.s32.totalorder %s90, %s92
      %p99 = scmp.eq.s32.totalorder %s26, 3
      %p100 = por %p98, %p99
      %p101 = scmp.ne.s32.totalorder %s92, %s93
      %p102 = scmp.eq.s32.totalorder %s26, 0
      %p103 = por %p101, %p102
      %p104 = scmp.ne.s32.totalorder %s92, %s93
      %p105 = scmp.eq.s32.totalorder %s27, 3
      %p106 = por %p104, %p105
      %p108 = scmp.ne.s32.totalorder %s93, %s107
      %p109 = scmp.eq.s32.totalorder %s27, 0
      %p110 = por %p108, %p109
      %s111 = ssub.s32 %s28, %s40
      %s112 = ssub.s32 %s29, %s36
      %s113 = sor.u32 %s111, %s112
      %p114 = scmp.eq.s32.totalorder %s113, 0
      %s116 = sadd.s32 %s115, 1
      %s117 = scalar_select %p114, %s115, %s116
      %p120 = pneg %p114
      %p121 = scmp.eq.s32.totalorder %s21, 3
      %p122 = por %p120, %p121
      %p123 = scmp.ne.s32.totalorder %s115, %s118
      %p124 = scmp.eq.s32.totalorder %s21, 0
      %p125 = por %p123, %p124
      %p126 = scmp.ne.s32.totalorder %s115, %s118
      %p127 = scmp.eq.s32.totalorder %s26, 3
      %p128 = por %p126, %p127
      %p129 = scmp.ne.s32.totalorder %s118, %s119
      %p130 = scmp.eq.s32.totalorder %s26, 0
      %p131 = por %p129, %p130
      %p132 = scmp.ne.s32.totalorder %s118, %s119
      %p133 = scmp.eq.s32.totalorder %s27, 3
      %p134 = por %p132, %p133
      %p136 = scmp.ne.s32.totalorder %s119, %s135
      %p137 = scmp.eq.s32.totalorder %s27, 0
      %p138 = por %p136, %p137
      %s139 = ssub.s32 %s28, %s40
      %s140 = ssub.s32 %s29, %s36
      %s141 = sor.u32 %s139, %s140
      %p142 = scmp.eq.s32.totalorder %s141, 0
      %s144 = sadd.s32 %s143, 1
      %s145 = scalar_select %p142, %s143, %s144
      %p148 = pneg %p142
      %p149 = scmp.eq.s32.totalorder %s21, 3
      %p150 = por %p148, %p149
      %p151 = scmp.ne.s32.totalorder %s143, %s146
      %p152 = scmp.eq.s32.totalorder %s21, 0
      %p153 = por %p151, %p152
      %p154 = scmp.ne.s32.totalorder %s143, %s146
      %p155 = scmp.eq.s32.totalorder %s26, 3
      %p156 = por %p154, %p155
      %p157 = scmp.ne.s32.totalorder %s146, %s147
      %p158 = scmp.eq.s32.totalorder %s26, 0
      %p159 = por %p157, %p158
      %p160 = scmp.ne.s32.totalorder %s146, %s147
      %p161 = scmp.eq.s32.totalorder %s27, 3
      %p162 = por %p160, %p161
      %p164 = scmp.ne.s32.totalorder %s147, %s163
      %p165 = scmp.eq.s32.totalorder %s27, 0
      %p166 = por %p164, %p165
      %p167 = scmp.le.s32.totalorder 1, %s21
      %p168 = scmp.lt.s32.totalorder %s21, 5
      %p169 = pnand %p167, %p168
      %p170 = pneg %p169
      // Predicated region
      $region9: #{tpu_custom_call.1} parent=5 // pred_check
        _
      $region10: #{tpu_custom_call.1} parent=5 // pred_check_branch
        %172 = sbr.rel (%p169) target = $region12
      $region11: #{tpu_custom_call.1} parent=5 // pred_region
        %s173 = ssub.s32 %s21, 1
        // Predicated region
        $region13: #{tpu_custom_call.1} parent=11 // pred_check
          %p174 = pneg %p82
        $region14: #{tpu_custom_call.1} parent=11 // pred_check_branch
          %176 = sbr.rel (%p174) target = $region16
        $region15: #{tpu_custom_call.1} parent=11 // pred_region
          %s178 = ssub.s32 512, 512
          %179 = vsyncadd [#allocation6], %s178
          %s180 = sshll.u32 [#allocation5], 4
          %s181 = int_to_ptr.vmem [resolvable:$true] %s180
          %186 = dma.hbm_to_vmem [thread:$0]  %s1, 512, %s181, [#allocation6], 64, 64, 4
        $region16: #{tpu_custom_call.1} parent=11 // pred_fallthru
          _
        // Predicated region
        $region17: #{tpu_custom_call.1} parent=11 // pred_check
          %p187 = pneg %p103
        $region18: #{tpu_custom_call.1} parent=11 // pred_check_branch
          %189 = sbr.rel (%p187) target = $region20
        $region19: #{tpu_custom_call.1} parent=11 // pred_region
          %s191 = ssub.s32 512, 512
          %192 = vsyncadd [#allocation6], %s191
          %s193 = sshll.u32 [#allocation7], 4
          %s194 = int_to_ptr.vmem [resolvable:$true] %s193
          %199 = dma.hbm_to_vmem [thread:$0]  %s2, 512, %s194, [#allocation6], 64, 64, 4
        $region20: #{tpu_custom_call.1} parent=11 // pred_fallthru
          _
      $region12: #{tpu_custom_call.1} parent=5 // pred_fallthru
        _
      %p200 = scmp.lt.s32.totalorder %s21, 4
      // Predicated region
      $region21: #{tpu_custom_call.1} parent=5 // pred_check
        %p201 = pneg %p200
      $region22: #{tpu_custom_call.1} parent=5 // pred_check_branch
        %203 = sbr.rel (%p201) target = $region24
      $region23: #{tpu_custom_call.1} parent=5 // pred_region
        // Predicated region
        $region25: #{tpu_custom_call.1} parent=23 // pred_check
          %p204 = pneg %p55
        $region26: #{tpu_custom_call.1} parent=23 // pred_check_branch
          %206 = sbr.rel (%p204) target = $region28
        $region27: #{tpu_custom_call.1} parent=23 // pred_region
          %s207 = sand.u32 %s45, 1
          %s208 = scalar_lea.sflag [#allocation3], %s207
          %s209 = sand.u32 %s45, 1
          %s210 = smul.addr %s209, 4
          %s211 = scalar_lea.vmem [#allocation2], %s210
          %s213 = ssub.s32 64, 64
          %214 = vsyncadd %s208, %s213
          %s215 = smul.addr %s28, 2
          %s216 = sadd.s32 %s29, %s215
          %s217 = smul.addr %s216, 64
          %s218 = scalar_lea.hbm %s0, %s217
          %s220 = sshll.u32 %s211, 4
          %s221 = int_to_ptr.vmem [resolvable:$true] %s220
          %223 = dma.hbm_to_vmem [thread:$0]  %s218, 64, %s221, %s208
        $region28: #{tpu_custom_call.1} parent=23 // pred_fallthru
          _
      $region24: #{tpu_custom_call.1} parent=5 // pred_fallthru
        _
      %p224 = scmp.le.s32.totalorder 1, %s21
      %p225 = scmp.lt.s32.totalorder %s21, 5
      %p226 = pnand %p224, %p225
      %p227 = pneg %p226
      // Predicated region
      $region29: #{tpu_custom_call.1} parent=5 // pred_check
        _
      $region30: #{tpu_custom_call.1} parent=5 // pred_check_branch
        %229 = sbr.rel (%p226) target = $region32
      $region31: #{tpu_custom_call.1} parent=5 // pred_region
        %s230 = ssub.s32 %s21, 1
        %s231 = sand.u32 %s48, 1
        %s232 = scalar_lea.sflag [#allocation3], %s231
        %s233 = sand.u32 %s48, 1
        %s234 = smul.addr %s233, 4
        %s235 = scalar_lea.vmem [#allocation2], %s234
        // Predicated region
        $region33: #{tpu_custom_call.1} parent=31 // pred_check
          %p236 = pneg %p61
        $region34: #{tpu_custom_call.1} parent=31 // pred_check_branch
          %238 = sbr.rel (%p236) target = $region36
        $region35: #{tpu_custom_call.1} parent=31 // pred_region
          %239 = dma.done %s232, 64
        $region36: #{tpu_custom_call.1} parent=31 // pred_fallthru
          _
        // Predicated region
        $region37: #{tpu_custom_call.1} parent=31 // pred_check
          %p240 = pneg %p82
        $region38: #{tpu_custom_call.1} parent=31 // pred_check_branch
          %242 = sbr.rel (%p240) target = $region40
        $region39: #{tpu_custom_call.1} parent=31 // pred_region
          %243 = dma.done [#allocation6], 512
        $region40: #{tpu_custom_call.1} parent=31 // pred_fallthru
          _
        // Predicated region
        $region41: #{tpu_custom_call.1} parent=31 // pred_check
          %p244 = pneg %p103
        $region42: #{tpu_custom_call.1} parent=31 // pred_check_branch
          %246 = sbr.rel (%p244) target = $region44
        $region43: #{tpu_custom_call.1} parent=31 // pred_region
          %247 = dma.done [#allocation6], 512
        $region44: #{tpu_custom_call.1} parent=31 // pred_fallthru
          _
        %s248 = sand.u32 %s48, 1
        %s249 = scalar_lea.sflag [#allocation3], %s248
        %s250 = sand.u32 %s48, 1
        %s251 = smul.addr %s250, 4
        %s252 = scalar_lea.vmem [#allocation2], %s251
        %p253 = pneg %p61
        %p254 = pneg %p58
        %p255 = pneg %p82
        %p256 = pneg %p79
        %p257 = pneg %p103
        %p258 = pneg %p100
        %p259 = pneg %p131
        %p260 = pneg %p128
        %s261 = sand.u32 %s118, 1
        %s262 = scalar_lea.sflag [#allocation4], %s261
        %s263 = sand.u32 %s118, 1
        %s264 = smul.addr %s263, 4
        %s265 = scalar_lea.vmem [#allocation8], %s264
        %p266 = pneg %p159
        %p267 = pneg %p156
        %s268 = sand.u32 %s146, 1
        %s269 = scalar_lea.sflag [#allocation10], %s268
        %s270 = sand.u32 %s146, 1
        %s271 = smul.addr %s270, 4
        %s272 = scalar_lea.vmem [#allocation9], %s271
        %v274 = vld [vmem:[%s235] sm:$0xf]
        %v275 = vld [vmem:[#allocation5] sm:$0xf]
        %v276 = vld [vmem:[#allocation5 + $0x4] sm:$0xf]
        %v277 = vld [vmem:[#allocation5 + $0x8] sm:$0xf]
        %v278 = vld [vmem:[#allocation5 + $0xc] sm:$0xf]
        %v279 = vld [vmem:[#allocation5 + $0x10] sm:$0xf]
        %v280 = vld [vmem:[#allocation5 + $0x14] sm:$0xf]
        %v281 = vld [vmem:[#allocation5 + $0x18] sm:$0xf]
        %v282 = vld [vmem:[#allocation5 + $0x1c] sm:$0xf]
        %v291 = vunpack.c.l.b16 %v275
        %v292 = vunpack.c.l.b16 %v276
        %v293 = vunpack.c.l.b16 %v277
        %v294 = vunpack.c.l.b16 %v278
        %v295 = vunpack.c.l.b16 %v279
        %v296 = vunpack.c.l.b16 %v280
        %v297 = vunpack.c.l.b16 %v281
        %v298 = vunpack.c.l.b16 %v282
        %v299 = vpack.c.b16 %v292, %v291
        %v300 = vpack.c.b16 %v294, %v293
        %v301 = vpack.c.b16 %v296, %v295
        %v302 = vpack.c.b16 %v298, %v297
        %vm307 = vcmask 523264
        %v309 = vsel %vm307, %v274, 0
        %311 = vmatprep.subr.bf16.mxu0 0
        %312 = vmatpush1.bf16.msra.mxu0 %v299
        %313 = vmatprep.subr.bf16.mxu0 0
        %314 = vmatpush1.bf16.msra.mxu0 %v300
        %315 = vmatprep.subr.bf16.mxu0 0
        %316 = vmatpush1.bf16.msra.mxu0 %v301
        %317 = vmatprep.subr.bf16.mxu0 0
        %318 = vmatpush1.bf16.msra.mxu0 %v302
        %319 = vmatprep.subr.bf16.mxu0 0
        %320 = vmatpush1.bf16.msra.mxu0 0
        %321 = vmatprep.subr.bf16.mxu0 0
        %322 = vmatpush1.bf16.msra.mxu0 0
        %323 = vmatprep.subr.bf16.mxu0 0
        %324 = vmatpush1.bf16.msra.mxu0 0
        %325 = vmatprep.subr.bf16.mxu0 0
        %326 = vmatpush1.bf16.msra.mxu0 0
        %327 = vmatprep.subr.bf16.mxu0 0
        %328 = vmatpush1.bf16.msra.mxu0 0
        %329 = vmatprep.subr.bf16.mxu0 0
        %330 = vmatpush1.bf16.msra.mxu0 0
        %331 = vmatprep.subr.bf16.mxu0 0
        %332 = vmatpush1.bf16.msra.mxu0 0
        %333 = vmatprep.subr.bf16.mxu0 0
        %334 = vmatpush1.bf16.msra.mxu0 0
        %335 = vmatprep.subr.bf16.mxu0 0
        %336 = vmatpush1.bf16.msra.mxu0 0
        %337 = vmatprep.subr.bf16.mxu0 0
        %338 = vmatpush1.bf16.msra.mxu0 0
        %339 = vmatprep.subr.bf16.mxu0 0
        %340 = vmatpush1.bf16.msra.mxu0 0
        %341 = vmatprep.subr.bf16.mxu0 0
        %342 = vmatpush1.bf16.msra.mxu0 0
        %343 = vmatprep.mubr.bf16.mxu0 0
        %344 = vmatmul.mubr.bf16.gmra.mrb[0].mxu0 %v309
        %v345 = vpop.f32.mrb[0].mxu0
        %v346 = vadd.f32 0.0, %v345
        %v347 = vpop.f32.mrb[0].mxu0
        %v348 = vpop.f32.mrb[0].mxu0
        %v349 = vpop.f32.mrb[0].mxu0
        %350 = vdwg.mxu0
        %v351 = vpack.c.bf16 %v346, %v346
        %vm352 = vcmask 519168
        %353 = vst.msk [vmem:[%s265] sm:$0xf] %vm352, %v351
        %v354 = vld [vmem:[#allocation7] sm:$0xf]
        %v355 = vld [vmem:[#allocation7 + $0x4] sm:$0xf]
        %v356 = vld [vmem:[#allocation7 + $0x8] sm:$0xf]
        %v357 = vld [vmem:[#allocation7 + $0xc] sm:$0xf]
        %v358 = vld [vmem:[#allocation7 + $0x10] sm:$0xf]
        %v359 = vld [vmem:[#allocation7 + $0x14] sm:$0xf]
        %v360 = vld [vmem:[#allocation7 + $0x18] sm:$0xf]
        %v361 = vld [vmem:[#allocation7 + $0x1c] sm:$0xf]
        %v370 = vunpack.c.l.b16 %v354
        %v371 = vunpack.c.l.b16 %v355
        %v372 = vunpack.c.l.b16 %v356
        %v373 = vunpack.c.l.b16 %v357
        %v374 = vunpack.c.l.b16 %v358
        %v375 = vunpack.c.l.b16 %v359
        %v376 = vunpack.c.l.b16 %v360
        %v377 = vunpack.c.l.b16 %v361
        %v378 = vpack.c.b16 %v371, %v370
        %v379 = vpack.c.b16 %v373, %v372
        %v380 = vpack.c.b16 %v375, %v374
        %v381 = vpack.c.b16 %v377, %v376
        %386 = vmatprep.subr.bf16.mxu0 0
        %387 = vmatpush1.bf16.msra.mxu0 %v378
        %388 = vmatprep.subr.bf16.mxu0 0
        %389 = vmatpush1.bf16.msra.mxu0 %v379
        %390 = vmatprep.subr.bf16.mxu0 0
        %391 = vmatpush1.bf16.msra.mxu0 %v380
        %392 = vmatprep.subr.bf16.mxu0 0
        %393 = vmatpush1.bf16.msra.mxu0 %v381
        %394 = vmatprep.subr.bf16.mxu0 0
        %395 = vmatpush1.bf16.msra.mxu0 0
        %396 = vmatprep.subr.bf16.mxu0 0
        %397 = vmatpush1.bf16.msra.mxu0 0
        %398 = vmatprep.subr.bf16.mxu0 0
        %399 = vmatpush1.bf16.msra.mxu0 0
        %400 = vmatprep.subr.bf16.mxu0 0
        %401 = vmatpush1.bf16.msra.mxu0 0
        %402 = vmatprep.subr.bf16.mxu0 0
        %403 = vmatpush1.bf16.msra.mxu0 0
        %404 = vmatprep.subr.bf16.mxu0 0
        %405 = vmatpush1.bf16.msra.mxu0 0
        %406 = vmatprep.subr.bf16.mxu0 0
        %407 = vmatpush1.bf16.msra.mxu0 0
        %408 = vmatprep.subr.bf16.mxu0 0
        %409 = vmatpush1.bf16.msra.mxu0 0
        %410 = vmatprep.subr.bf16.mxu0 0
        %411 = vmatpush1.bf16.msra.mxu0 0
        %412 = vmatprep.subr.bf16.mxu0 0
        %413 = vmatpush1.bf16.msra.mxu0 0
        %414 = vmatprep.subr.bf16.mxu0 0
        %415 = vmatpush1.bf16.msra.mxu0 0
        %416 = vmatprep.subr.bf16.mxu0 0
        %417 = vmatpush1.bf16.msra.mxu0 0
        %418 = vmatprep.mubr.bf16.mxu0 0
        %419 = vmatmul.mubr.bf16.gmra.mrb[0].mxu0 %v309
        %v420 = vpop.f32.mrb[0].mxu0
        %v421 = vadd.f32 0.0, %v420
        %v422 = vpop.f32.mrb[0].mxu0
        %v423 = vpop.f32.mrb[0].mxu0
        %v424 = vpop.f32.mrb[0].mxu0
        %425 = vdwg.mxu0
        %v426 = vpack.c.bf16 %v421, %v421
        %427 = vst.msk [vmem:[%s272] sm:$0xf] %vm352, %v426
        %s428 = sand.u32 %s118, 1
        %s429 = scalar_lea.sflag [#allocation4], %s428
        %s430 = sand.u32 %s118, 1
        %s431 = smul.addr %s430, 4
        %s432 = scalar_lea.vmem [#allocation8], %s431
        %s433 = sand.u32 %s146, 1
        %s434 = scalar_lea.sflag [#allocation10], %s433
        %s435 = sand.u32 %s146, 1
        %s436 = smul.addr %s435, 4
        %s437 = scalar_lea.vmem [#allocation9], %s436
        // Predicated region
        $region45: #{tpu_custom_call.1} parent=31 // pred_check
          %p438 = pneg %p128
        $region46: #{tpu_custom_call.1} parent=31 // pred_check_branch
          %440 = sbr.rel (%p438) target = $region48
        $region47: #{tpu_custom_call.1} parent=31 // pred_region
          %s442 = ssub.s32 64, 64
          %443 = vsyncadd %s429, %s442
          %s444 = smul.addr %s30, 2
          %s445 = sadd.s32 %s31, %s444
          %s446 = smul.addr %s445, 64
          %s447 = scalar_lea.hbm %s3, %s446
          %s449 = sshll.u32 %s432, 4
          %s450 = int_to_ptr.vmem [resolvable:$true] %s449
          %452 = dma.vmem_to_hbm [thread:$0]  %s450, 64, %s447, %s429
        $region48: #{tpu_custom_call.1} parent=31 // pred_fallthru
          _
        // Predicated region
        $region49: #{tpu_custom_call.1} parent=31 // pred_check
          %p453 = pneg %p156
        $region50: #{tpu_custom_call.1} parent=31 // pred_check_branch
          %455 = sbr.rel (%p453) target = $region52
        $region51: #{tpu_custom_call.1} parent=31 // pred_region
          %s457 = ssub.s32 64, 64
          %458 = vsyncadd %s434, %s457
          %s459 = smul.addr %s30, 2
          %s460 = sadd.s32 %s31, %s459
          %s461 = smul.addr %s460, 64
          %s462 = scalar_lea.hbm %s4, %s461
          %s464 = sshll.u32 %s437, 4
          %s465 = int_to_ptr.vmem [resolvable:$true] %s464
          %467 = dma.vmem_to_hbm [thread:$0]  %s465, 64, %s462, %s434
        $region52: #{tpu_custom_call.1} parent=31 // pred_fallthru
          _
      $region32: #{tpu_custom_call.1} parent=5 // pred_fallthru
        _
      %p468 = scmp.le.s32.totalorder 2, %s21
      // Predicated region
      $region53: #{tpu_custom_call.1} parent=5 // pred_check
        %p469 = pneg %p468
      $region54: #{tpu_custom_call.1} parent=5 // pred_check_branch
        %471 = sbr.rel (%p469) target = $region56
      $region55: #{tpu_custom_call.1} parent=5 // pred_region
        %s472 = ssub.s32 %s21, 2
        // Predicated region
        $region57: #{tpu_custom_call.1} parent=55 // pred_check
          %p473 = pneg %p134
        $region58: #{tpu_custom_call.1} parent=55 // pred_check_branch
          %475 = sbr.rel (%p473) target = $region60
        $region59: #{tpu_custom_call.1} parent=55 // pred_region
          %s476 = sand.u32 %s119, 1
          %s477 = scalar_lea.sflag [#allocation4], %s476
          %s478 = sand.u32 %s119, 1
          %s479 = smul.addr %s478, 4
          %s480 = scalar_lea.vmem [#allocation8], %s479
          %481 = dma.done %s477, 64
        $region60: #{tpu_custom_call.1} parent=55 // pred_fallthru
          _
        // Predicated region
        $region61: #{tpu_custom_call.1} parent=55 // pred_check
          %p482 = pneg %p162
        $region62: #{tpu_custom_call.1} parent=55 // pred_check_branch
          %484 = sbr.rel (%p482) target = $region64
        $region63: #{tpu_custom_call.1} parent=55 // pred_region
          %s485 = sand.u32 %s147, 1
          %s486 = scalar_lea.sflag [#allocation10], %s485
          %s487 = sand.u32 %s147, 1
          %s488 = smul.addr %s487, 4
          %s489 = scalar_lea.vmem [#allocation9], %s488
          %490 = dma.done %s486, 64
        $region64: #{tpu_custom_call.1} parent=55 // pred_fallthru
          _
      $region56: #{tpu_custom_call.1} parent=5 // pred_fallthru
        _
    $region6: #{tpu_custom_call.1} parent=1 // loop_footer
      %s25 = sadd.s32 1, %s21
    $region7: #{tpu_custom_call.1} parent=1 // loop_footer_branch
      %20 = sbr.rel target = $region3
    $region8: #{tpu_custom_call.1} parent=1 // loop_exit
      _
    %491 = vsyncpa [#allocation3], 1
    %s492 = scalar_lea.sflag [#allocation3], 1
    %493 = vsyncpa %s492, 1
    %494 = vsyncpa [#allocation6], 1
    %495 = vsyncpa [#allocation4], 1
    %s496 = scalar_lea.sflag [#allocation4], 1
    %497 = vsyncpa %s496, 1
    %498 = vsyncpa [#allocation10], 1
    %s499 = scalar_lea.sflag [#allocation10], 1
    %500 = vsyncpa %s499, 1

</llo_original>
